<compile_context>
chip_gen: v5e
topology: v5e:2x2
jax: 0.10.0
libtpu: 0.0.40
codegen_flags: <defaults>
</compile_context>

<pallas_src>
import jax
import jax.numpy as jnp
from jax import lax
from jax.experimental import pallas as pl
from jax.experimental.pallas import tpu as pltpu


def _round_up(x, m):
    return ((x + m - 1) // m) * m


def _sublane(dtype):
    return {4: 8, 2: 16, 1: 32}.get(jnp.dtype(dtype).itemsize, 8)


def _prec(dtype):
    # fp32 contract precision for f32 operands; default otherwise.
    return lax.Precision.HIGHEST if jnp.dtype(dtype) == jnp.float32 else None


# ----------------------------------------------------------------------------
# Kernel body
# ----------------------------------------------------------------------------
def _attention_body(out_ref, ctx_ref, w_mix_ref, w_out_ref, b_ref, y_ref, attn_ref):
    o = out_ref[...]                       # (Bt, Tq, H) native dtype
    c = ctx_ref[...]                       # (Bt, Tk, H)
    prec_in = _prec(o.dtype)

    # scores = output @ context^T per batch; contract the last axes directly
    # (no transposed copy of context), accumulate in f32 on the MXU.
    s = jnp.einsum("bqh,bkh->bqk", o, c,
                   preferred_element_type=jnp.float32, precision=prec_in)

    # softmax over the key (input_size) axis, in f32 (exact division)
    m = jnp.max(s, axis=-1, keepdims=True)
    e = jnp.exp(s - m)
    attn = e / jnp.sum(e, axis=-1, keepdims=True)        # (Bt, Tq, Tk)

    if attn_ref is not None:
        attn_ref[...] = attn.astype(attn_ref.dtype)

    # mix = attn @ context  (attn fed back at the context dtype)
    mix = jnp.einsum("bqk,bkh->bqh", attn.astype(c.dtype), c,
                     preferred_element_type=jnp.float32, precision=prec_in)

    # linear_out(cat([mix, output], -1)) == mix @ W_mix^T + output @ W_out^T + b
    # Fold (Bt, Tq) into the MXU M dimension for better MXU fill.
    bt, tq, h = mix.shape
    wd = w_mix_ref.dtype
    prec_w = _prec(wd)
    mix2 = mix.reshape(bt * tq, h).astype(wd)
    o2 = o.reshape(bt * tq, h).astype(wd)
    y = (jnp.dot(mix2, w_mix_ref[...],
                 preferred_element_type=jnp.float32, precision=prec_w)
         + jnp.dot(o2, w_out_ref[...],
                   preferred_element_type=jnp.float32, precision=prec_w)
         + b_ref[...].astype(jnp.float32))                # bias broadcast over rows
    y_ref[...] = jnp.tanh(y).reshape(bt, tq, h).astype(y_ref.dtype)


def _kernel_with_attn(out_ref, ctx_ref, wm_ref, wo_ref, b_ref, y_ref, attn_ref):
    _attention_body(out_ref, ctx_ref, wm_ref, wo_ref, b_ref, y_ref, attn_ref)


def _kernel_no_attn(out_ref, ctx_ref, wm_ref, wo_ref, b_ref, y_ref):
    _attention_body(out_ref, ctx_ref, wm_ref, wo_ref, b_ref, y_ref, None)


# ----------------------------------------------------------------------------
# Tiling heuristics
# ----------------------------------------------------------------------------
def _tpu_vmem_bytes():
    try:
        return int(pltpu.get_tpu_info().vmem_capacity_bytes)
    except Exception:
        return 64 * 1024 * 1024            # conservative fallback (v7x per-TC)


def _num_tensorcores():
    try:
        kind = str(getattr(jax.devices()[0], "device_kind", "")).lower()
        if "v7" in kind:                   # v7x: 2 TensorCores per chip
            return 2
    except Exception:
        pass
    return 1                               # v5e / v6e: single TC


def _choose_batch_tile(B, Tq, Tk, H, in_dtype, w_dtype, return_attn, vmem_bytes):
    """Pick batch tile Bt: fill the MXU M dim, stay inside a generation-aware
    VMEM budget, and (v7x only) keep >= 2 grid steps so both TCs get work."""
    in_sz = jnp.dtype(in_dtype).itemsize
    w_sz = jnp.dtype(w_dtype).itemsize
    tq_p = _round_up(Tq, _sublane(in_dtype))
    tk_p = _round_up(Tk, 128)
    h_p = _round_up(H, 128)

    per_batch = (
        2 * (tq_p + tk_p) * h_p * in_sz                       # dbl-buffered inputs
        + 2 * tq_p * h_p * in_sz                              # dbl-buffered y
        + (2 * tq_p * tk_p * in_sz if return_attn else 0)     # dbl-buffered attn
        + 3 * tq_p * tk_p * 4 + 2 * tq_p * h_p * 4            # f32 intermediates
    )
    fixed = 2 * (2 * h_p * h_p + h_p) * w_sz                  # weights + bias
    budget = int(vmem_bytes * 0.45) - fixed
    cap = max(1, budget // max(per_batch, 1))
    target = max(1, pl.cdiv(256, tq_p))                       # ~256 MXU rows/step
    bt = int(min(B, cap, target))
    if _num_tensorcores() >= 2 and B >= 2 and pl.cdiv(B, bt) < 2:
        bt = pl.cdiv(B, 2)                                    # keep both TCs busy
    return max(1, int(bt))


# ----------------------------------------------------------------------------
# Wrapper
# ----------------------------------------------------------------------------
def attention_forward(output, context, w_linear_out, b_linear_out, *,
                      return_attn=True, attn_dtype=None):
    """Forward pass of Attention (use_weight=False).

    output       : (B, Tq, H)   decoder output
    context      : (B, Tk, H)   encoder context
    w_linear_out : (H, 2H)      nn.Linear(2*dim, dim).weight
    b_linear_out : (H,)         bias
    Returns (attended (B,Tq,H), attn (B,Tq,Tk)) like the module, or just the
    attended output when return_attn=False (skips the attn HBM writeback).
    """
    B, Tq, H = output.shape
    _, Tk, Hc = context.shape
    assert Hc == H, "context hidden size must match output hidden size"

    # Split the Linear(2H, H) weight: first H input cols multiply `mix`, last H
    # multiply `output`; transpose so the kernel does x @ W (tiny, one-time).
    w = jnp.asarray(w_linear_out)
    w_mix_t = jnp.transpose(w[:, :H])                      # (H, H)
    w_out_t = jnp.transpose(w[:, H:])                      # (H, H)
    bias = jnp.asarray(b_linear_out).reshape(1, H)

    vmem_bytes = _tpu_vmem_bytes()
    Bt = _choose_batch_tile(B, Tq, Tk, H, output.dtype, w.dtype,
                            return_attn, vmem_bytes)
    grid = (pl.cdiv(B, Bt),)   # B need not divide Bt: last block is masked

    # Full (unpadded) trailing dims in the block shapes -> no wrapper-side
    # jnp.pad / slice HBM round trips; Mosaic masks non-(8,128) tails itself.
    in_specs = [
        pl.BlockSpec((Bt, Tq, H), lambda b: (b, 0, 0)),    # output
        pl.BlockSpec((Bt, Tk, H), lambda b: (b, 0, 0)),    # context
        pl.BlockSpec((H, H), lambda b: (0, 0)),            # w_mix^T (const-indexed)
        pl.BlockSpec((H, H), lambda b: (0, 0)),            # w_out^T (const-indexed)
        pl.BlockSpec((1, H), lambda b: (0, 0)),            # bias
    ]
    y_spec = pl.BlockSpec((Bt, Tq, H), lambda b: (b, 0, 0))
    y_shape = jax.ShapeDtypeStruct((B, Tq, H), output.dtype)

    compiler_params = pltpu.CompilerParams(
        dimension_semantics=("parallel",),
        vmem_limit_bytes=int(min(100 * 1024 * 1024, vmem_bytes * 3 // 4)),
    )

    if return_attn:
        attn_spec = pl.BlockSpec((Bt, Tq, Tk), lambda b: (b, 0, 0))
        attn_shape = jax.ShapeDtypeStruct((B, Tq, Tk), attn_dtype or output.dtype)
        y, attn = pl.pallas_call(
            _kernel_with_attn,
            grid=grid,
            in_specs=in_specs,
            out_specs=(y_spec, attn_spec),
            out_shape=(y_shape, attn_shape),
            compiler_params=compiler_params,
        )(output, context, w_mix_t, w_out_t, bias)
        return y, attn

    y = pl.pallas_call(
        _kernel_no_attn,
        grid=grid,
        in_specs=in_specs,
        out_specs=y_spec,
        out_shape=y_shape,
        compiler_params=compiler_params,
    )(output, context, w_mix_t, w_out_t, bias)
    return y


# ----------------------------------------------------------------------------
# Pure-JAX reference (f32, highest matmul precision, matches PyTorch math)
# ----------------------------------------------------------------------------
def _reference(output, context, w_linear_out, b_linear_out):
    hp = lax.Precision.HIGHEST
    scores = jnp.einsum("bqh,bkh->bqk", output, context, precision=hp)
    attn = jax.nn.softmax(scores, axis=-1)
    mix = jnp.einsum("bqk,bkh->bqh", attn, context, precision=hp)
    comb = jnp.concatenate([mix, output], axis=-1)
    y = jnp.tanh(jnp.einsum("bqd,hd->bqh", comb, w_linear_out, precision=hp)
                 + b_linear_out)
    return y, attn


if __name__ == "__main__":
    # Small shapes consistent with the module (dim == hidden_size)
    B, Tq, Tk, H = 2, 8, 16, 32

    key = jax.random.PRNGKey(0)
    k1, k2, k3, k4 = jax.random.split(key, 4)

    output = jax.random.normal(k1, (B, Tq, H), dtype=jnp.float32)
    context = jax.random.normal(k2, (B, Tk, H), dtype=jnp.float32)

    # Deterministic parameter init (Linear(2*dim, dim)): weight (H, 2H), bias (H,)
    w_linear_out = jax.random.normal(k3, (H, 2 * H), dtype=jnp.float32) * 0.1
    b_linear_out = jax.random.normal(k4, (H,), dtype=jnp.float32) * 0.1

    y, attn = attention_forward(output, context, w_linear_out, b_linear_out)
    jax.block_until_ready((y, attn))

    y_ref, attn_ref = _reference(output, context, w_linear_out, b_linear_out)
    assert y.shape == (B, Tq, H) and attn.shape == (B, Tq, Tk)
    assert jnp.allclose(y, y_ref, atol=2e-3, rtol=2e-3), "output mismatch"
    assert jnp.allclose(attn, attn_ref, atol=2e-3, rtol=2e-3), "attn mismatch"

    # attn-free entry point (skips the attention-map HBM writeback)
    y_only = attention_forward(output, context, w_linear_out, b_linear_out,
                               return_attn=False)
    jax.block_until_ready(y_only)
    assert jnp.allclose(y_only, y_ref, atol=2e-3, rtol=2e-3), "y-only mismatch"

    print("KERNEL_OK")
</pallas_src>

<mosaic_0001>
module attributes {stable_mosaic.version = 11 : i64} {
  func.func @_kernel_with_attn(%arg0: i32, %arg1: memref<2x8x32xf32, #tpu.memory_space<vmem>>, %arg2: memref<2x16x32xf32, #tpu.memory_space<vmem>>, %arg3: memref<32x32xf32, #tpu.memory_space<vmem>>, %arg4: memref<32x32xf32, #tpu.memory_space<vmem>>, %arg5: memref<1x32xf32, #tpu.memory_space<vmem>>, %arg6: memref<2x8x32xf32, #tpu.memory_space<vmem>>, %arg7: memref<2x8x16xf32, #tpu.memory_space<vmem>>) attributes {dimension_semantics = [#tpu.dimension_semantics<parallel>], iteration_bounds = array<i64: 1>, scalar_prefetch = 0 : i64, scratch_operands = 0 : i64, tpu.core_type = #tpu.core_type<tc>, window_params = [{transform_indices = @transform_0, window_bounds = array<i64: 2, 8, 32>}, {transform_indices = @transform_1, window_bounds = array<i64: 2, 16, 32>}, {pipeline_mode = #tpu.pipeline_mode<synchronous>, transform_indices = @transform_2, window_bounds = array<i64: 32, 32>}, {pipeline_mode = #tpu.pipeline_mode<synchronous>, transform_indices = @transform_3, window_bounds = array<i64: 32, 32>}, {pipeline_mode = #tpu.pipeline_mode<synchronous>, transform_indices = @transform_4, window_bounds = array<i64: 1, 32>}, {transform_indices = @transform_5, window_bounds = array<i64: 2, 8, 32>}, {transform_indices = @transform_6, window_bounds = array<i64: 2, 8, 16>}]} {
    %c0 = arith.constant 0 : index
    %c0_0 = arith.constant 0 : index
    %c0_1 = arith.constant 0 : index
    %0 = vector.load %arg1[%c0, %c0_0, %c0_1] : memref<2x8x32xf32, #tpu.memory_space<vmem>>, vector<2x8x32xf32>
    %c0_2 = arith.constant 0 : index
    %c0_3 = arith.constant 0 : index
    %c0_4 = arith.constant 0 : index
    %1 = vector.load %arg2[%c0_2, %c0_3, %c0_4] : memref<2x16x32xf32, #tpu.memory_space<vmem>>, vector<2x16x32xf32>
    "tpu.trace_start"() <{level = 10 : i32, message = "bqh,bkh->bqk"}> : () -> ()
    %cst = arith.constant dense<0.000000e+00> : vector<2x8x16xf32>
    %2 = tpu.matmul %0, %1, %cst {dimension_numbers = #tpu.dot_dimension_numbers<[2], [2], [1], [1], [0, 0, 0, 1, 1, 1], [0], [0]>, precision = #tpu.contract_precision<fp32>} : vector<2x8x32xf32>, vector<2x16x32xf32>, vector<2x8x16xf32> -> vector<2x8x16xf32>
    "tpu.trace_stop"() : () -> ()
    %cst_5 = arith.constant dense<0xFF800000> : vector<2x8xf32>
    %3 = vector.multi_reduction <maximumf>, %2, %cst_5 [2] : vector<2x8x16xf32> to vector<2x8xf32>
    %4 = vector.shape_cast %3 : vector<2x8xf32> to vector<2x8x1xf32>
    %5 = vector.broadcast %4 : vector<2x8x1xf32> to vector<2x8x16xf32>
    %6 = arith.subf %2, %5 : vector<2x8x16xf32>
    %7 = math.exp %6 : vector<2x8x16xf32>
    %cst_6 = arith.constant dense<0.000000e+00> : vector<2x8xf32>
    %8 = vector.multi_reduction <add>, %7, %cst_6 [2] : vector<2x8x16xf32> to vector<2x8xf32>
    %9 = vector.shape_cast %8 : vector<2x8xf32> to vector<2x8x1xf32>
    %10 = vector.broadcast %9 : vector<2x8x1xf32> to vector<2x8x16xf32>
    %11 = arith.divf %7, %10 : vector<2x8x16xf32>
    %c0_7 = arith.constant 0 : index
    %c0_8 = arith.constant 0 : index
    %c0_9 = arith.constant 0 : index
    %12 = vector.load %arg7[%c0_7, %c0_8, %c0_9] : memref<2x8x16xf32, #tpu.memory_space<vmem>>, vector<2x8x16xf32>
    tpu.vector_store %arg7[%c0_7, %c0_8, %c0_9], %11 {strides = array<i32>} : memref<2x8x16xf32, #tpu.memory_space<vmem>>, vector<2x8x16xf32>,
    "tpu.trace_start"() <{level = 10 : i32, message = "bqk,bkh->bqh"}> : () -> ()
    %cst_10 = arith.constant dense<0.000000e+00> : vector<2x8x32xf32>
    %13 = tpu.matmul %11, %1, %cst_10 {dimension_numbers = #tpu.dot_dimension_numbers<[2], [1], [1], [2], [0, 0, 0, 1, 1, 2], [0], [0]>, precision = #tpu.contract_precision<fp32>} : vector<2x8x16xf32>, vector<2x16x32xf32>, vector<2x8x32xf32> -> vector<2x8x32xf32>
    "tpu.trace_stop"() : () -> ()
    %14 = vector.shape_cast %13 : vector<2x8x32xf32> to vector<16x32xf32>
    %15 = vector.shape_cast %0 : vector<2x8x32xf32> to vector<16x32xf32>
    %c0_11 = arith.constant 0 : index
    %c0_12 = arith.constant 0 : index
    %16 = vector.load %arg3[%c0_11, %c0_12] : memref<32x32xf32, #tpu.memory_space<vmem>>, vector<32x32xf32>
    %cst_13 = arith.constant dense<0.000000e+00> : vector<16x32xf32>
    %17 = tpu.matmul %14, %16, %cst_13 {dimension_numbers = #tpu.dot_dimension_numbers<[1], [0], [0], [1], [0, 0, 1, 1], [], []>, precision = #tpu.contract_precision<fp32>} : vector<16x32xf32>, vector<32x32xf32>, vector<16x32xf32> -> vector<16x32xf32>
    %c0_14 = arith.constant 0 : index
    %c0_15 = arith.constant 0 : index
    %18 = vector.load %arg4[%c0_14, %c0_15] : memref<32x32xf32, #tpu.memory_space<vmem>>, vector<32x32xf32>
    %cst_16 = arith.constant dense<0.000000e+00> : vector<16x32xf32>
    %19 = tpu.matmul %15, %18, %cst_16 {dimension_numbers = #tpu.dot_dimension_numbers<[1], [0], [0], [1], [0, 0, 1, 1], [], []>, precision = #tpu.contract_precision<fp32>} : vector<16x32xf32>, vector<32x32xf32>, vector<16x32xf32> -> vector<16x32xf32>
    %20 = arith.addf %17, %19 : vector<16x32xf32>
    %c0_17 = arith.constant 0 : index
    %c0_18 = arith.constant 0 : index
    %21 = vector.load %arg5[%c0_17, %c0_18] : memref<1x32xf32, #tpu.memory_space<vmem>>, vector<1x32xf32>
    %22 = vector.broadcast %21 : vector<1x32xf32> to vector<16x32xf32>
    %23 = arith.addf %20, %22 : vector<16x32xf32>
    %24 = math.tanh %23 : vector<16x32xf32>
    %25 = vector.shape_cast %24 : vector<16x32xf32> to vector<2x8x32xf32>
    %c0_19 = arith.constant 0 : index
    %c0_20 = arith.constant 0 : index
    %c0_21 = arith.constant 0 : index
    %26 = vector.load %arg6[%c0_19, %c0_20, %c0_21] : memref<2x8x32xf32, #tpu.memory_space<vmem>>, vector<2x8x32xf32>
    tpu.vector_store %arg6[%c0_19, %c0_20, %c0_21], %25 {strides = array<i32>} : memref<2x8x32xf32, #tpu.memory_space<vmem>>, vector<2x8x32xf32>,
    return
  }
  func.func @transform_0(%arg0: i32) -> (i32, i32, i32) {
    %c0_i32 = arith.constant 0 : i32
    %c0_i32_0 = arith.constant 0 : i32
    %c0_i32_1 = arith.constant 0 : i32
    return %arg0, %c0_i32, %c0_i32_0 : i32, i32, i32
  }
  func.func @transform_1(%arg0: i32) -> (i32, i32, i32) {
    %c0_i32 = arith.constant 0 : i32
    %c0_i32_0 = arith.constant 0 : i32
    %c0_i32_1 = arith.constant 0 : i32
    return %arg0, %c0_i32, %c0_i32_0 : i32, i32, i32
  }
  func.func @transform_2(%arg0: i32) -> (i32, i32) {
    %c0_i32 = arith.constant 0 : i32
    %c0_i32_0 = arith.constant 0 : i32
    %c0_i32_1 = arith.constant 0 : i32
    return %c0_i32, %c0_i32_0 : i32, i32
  }
  func.func @transform_3(%arg0: i32) -> (i32, i32) {
    %c0_i32 = arith.constant 0 : i32
    %c0_i32_0 = arith.constant 0 : i32
    %c0_i32_1 = arith.constant 0 : i32
    return %c0_i32, %c0_i32_0 : i32, i32
  }
  func.func @transform_4(%arg0: i32) -> (i32, i32) {
    %c0_i32 = arith.constant 0 : i32
    %c0_i32_0 = arith.constant 0 : i32
    %c0_i32_1 = arith.constant 0 : i32
    return %c0_i32, %c0_i32_0 : i32, i32
  }
  func.func @transform_5(%arg0: i32) -> (i32, i32, i32) {
    %c0_i32 = arith.constant 0 : i32
    %c0_i32_0 = arith.constant 0 : i32
    %c0_i32_1 = arith.constant 0 : i32
    return %arg0, %c0_i32, %c0_i32_0 : i32, i32, i32
  }
  func.func @transform_6(%arg0: i32) -> (i32, i32, i32) {
    %c0_i32 = arith.constant 0 : i32
    %c0_i32_0 = arith.constant 0 : i32
    %c0_i32_1 = arith.constant 0 : i32
    return %arg0, %c0_i32, %c0_i32_0 : i32, i32, i32
  }
}

</mosaic_0001>

<llo_original>
// kernel: tpu_custom_call.1
$region0: #{tpu_custom_call.1}
  #allocation0 [shape = 'u32[]', space=smem, size = 0x4, offset = 0x4, fixed_abs, tag = 'smem constant byte address 0x4 - core index']
  #allocation1 [shape = 'u32[72,128]{1,0:T(1,128)}', space=vmem, size = 0x9000, scoped, tag = 'internal scratch']
  %s0 = inlined_call_operand.hbm [shape: f32[2,8,32], index: 0, kind: input, shape index: {}]
  %s1 = inlined_call_operand.hbm [shape: f32[2,16,32], index: 1, kind: input, shape index: {}]
  %s2 = inlined_call_operand.hbm [shape: f32[32,32], index: 2, kind: input, shape index: {}]
  %s3 = inlined_call_operand.hbm [shape: f32[32,32], index: 3, kind: input, shape index: {}]
  %s4 = inlined_call_operand.vmem [shape: f32[1,32], index: 4, kind: input, shape index: {}]
  %s5 = inlined_call_operand.hbm [shape: f32[2,8,32], index: 5, kind: output, shape index: {0}]
  %s6 = inlined_call_operand.hbm [shape: f32[2,8,16], index: 6, kind: output, shape index: {1}]
  %7 = xla_tuple %s5, %s6
  %s8 = sld [smem:[#allocation0]]
  $region54: #{tpu_custom_call.1} parent=0
    _
  %s10 = ssub.s32 1, %s8
  %s11 = scalar_select 0, %s10, %s8
  $region1: #{tpu_custom_call.1} parent=0
    #allocation2 [shape = 'u8[8192]{0}', space=vmem, size = 0x2000, scoped, tag = 'input window, operand 0, single buffered']
    #allocation3 [shape = 's32[1]{0}', space=sflag, size = 0x4, scoped, tag = 'scoped memory for tpu_custom_call.1']
    #allocation4 [shape = 's32[1]{0}', space=sflag, size = 0x4, scoped, tag = 'scoped memory for tpu_custom_call.1']
    #allocation5 [shape = 'u8[16384]{0}', space=vmem, size = 0x4000, scoped, tag = 'input window, operand 1, single buffered']
    #allocation6 [shape = 's32[1]{0}', space=sflag, size = 0x4, scoped, tag = 'scoped memory for tpu_custom_call.1']
    #allocation7 [shape = 'u8[16384]{0}', space=vmem, size = 0x4000, scoped, tag = 'input window, operand 2, single buffered']
    #allocation8 [shape = 'u8[16384]{0}', space=vmem, size = 0x4000, scoped, tag = 'input window, operand 3, single buffered']
    #allocation9 [shape = 's32[1]{0}', space=sflag, size = 0x4, scoped, tag = 'scoped memory for tpu_custom_call.1']
    #allocation10 [shape = 'u8[8192]{0}', space=vmem, size = 0x2000, scoped, tag = 'output window, operand 0, single buffered']
    #allocation11 [shape = 'u8[8192]{0}', space=vmem, size = 0x2000, scoped, tag = 'output window, operand 1, single buffered']
    #allocation12 [shape = 's32[1]{0}', space=sflag, size = 0x4, scoped, tag = 'scoped memory for tpu_custom_call.1']
    %12 = vsyncpa [#allocation3], 0
    %13 = vsyncpa [#allocation6], 0
    %14 = vsyncpa [#allocation9], 0
    %15 = vsyncpa [#allocation4], 0
    %16 = vsyncpa [#allocation12], 0
    // Predicated region
    $region2: #{tpu_custom_call.1} parent=1 // pred_check
      _
    $region3: #{tpu_custom_call.1} parent=1 // pred_check_branch
      %18 = sbr.rel (0) target = $region5
    $region4: #{tpu_custom_call.1} parent=1 // pred_region
      %20 = vsyncadd [#allocation3], 0
      %s21 = sshll.u32 %s0, 4
      %s22 = int_to_ptr.hbm [resolvable:$true] %s21
      %s23 = sshll.u32 [#allocation2], 4
      %s24 = int_to_ptr.vmem [resolvable:$true] %s23
      %29 = dma.hbm_to_vmem [thread:$0]  %s22, 256, %s24, [#allocation3], 128, 128, 8
    $region5: #{tpu_custom_call.1} parent=1 // pred_fallthru
      _
    // Predicated region
    $region6: #{tpu_custom_call.1} parent=1 // pred_check
      _
    $region7: #{tpu_custom_call.1} parent=1 // pred_check_branch
      %31 = sbr.rel (0) target = $region9
    $region8: #{tpu_custom_call.1} parent=1 // pred_region
      %33 = vsyncadd [#allocation6], 0
      %s34 = sshll.u32 %s1, 4
      %s35 = int_to_ptr.hbm [resolvable:$true] %s34
      %s36 = sshll.u32 [#allocation5], 4
      %s37 = int_to_ptr.vmem [resolvable:$true] %s36
      %42 = dma.hbm_to_vmem [thread:$0]  %s35, 512, %s37, [#allocation6], 128, 128, 8
    $region9: #{tpu_custom_call.1} parent=1 // pred_fallthru
      _
    // Predicated region
    $region10: #{tpu_custom_call.1} parent=1 // pred_check
      _
    $region11: #{tpu_custom_call.1} parent=1 // pred_check_branch
      %44 = sbr.rel (0) target = $region13
    $region12: #{tpu_custom_call.1} parent=1 // pred_region
      %46 = vsyncadd [#allocation6], 0
      %s47 = sshll.u32 %s2, 4
      %s48 = int_to_ptr.hbm [resolvable:$true] %s47
      %s49 = sshll.u32 [#allocation7], 4
      %s50 = int_to_ptr.vmem [resolvable:$true] %s49
      %55 = dma.hbm_to_vmem [thread:$0]  %s48, 512, %s50, [#allocation6], 128, 128, 8
    $region13: #{tpu_custom_call.1} parent=1 // pred_fallthru
      _
    // Predicated region
    $region14: #{tpu_custom_call.1} parent=1 // pred_check
      _
    $region15: #{tpu_custom_call.1} parent=1 // pred_check_branch
      %57 = sbr.rel (0) target = $region17
    $region16: #{tpu_custom_call.1} parent=1 // pred_region
      %59 = vsyncadd [#allocation9], 0
      %s60 = sshll.u32 %s3, 4
      %s61 = int_to_ptr.hbm [resolvable:$true] %s60
      %s62 = sshll.u32 [#allocation8], 4
      %s63 = int_to_ptr.vmem [resolvable:$true] %s62
      %68 = dma.hbm_to_vmem [thread:$0]  %s61, 512, %s63, [#allocation9], 128, 128, 8
    $region17: #{tpu_custom_call.1} parent=1 // pred_fallthru
      _
    // Predicated region
    $region18: #{tpu_custom_call.1} parent=1 // pred_check
      _
    $region19: #{tpu_custom_call.1} parent=1 // pred_check_branch
      %70 = sbr.rel (0) target = $region21
    $region20: #{tpu_custom_call.1} parent=1 // pred_region
      _
    $region21: #{tpu_custom_call.1} parent=1 // pred_fallthru
      _
    // Predicated region
    $region22: #{tpu_custom_call.1} parent=1 // pred_check
      _
    $region23: #{tpu_custom_call.1} parent=1 // pred_check_branch
      %72 = sbr.rel (0) target = $region25
    $region24: #{tpu_custom_call.1} parent=1 // pred_region
      %74 = dma.done [#allocation3], 256
    $region25: #{tpu_custom_call.1} parent=1 // pred_fallthru
      _
    // Predicated region
    $region26: #{tpu_custom_call.1} parent=1 // pred_check
      _
    $region27: #{tpu_custom_call.1} parent=1 // pred_check_branch
      %76 = sbr.rel (0) target = $region29
    $region28: #{tpu_custom_call.1} parent=1 // pred_region
      %78 = dma.done [#allocation6], 512
    $region29: #{tpu_custom_call.1} parent=1 // pred_fallthru
      _
    // Predicated region
    $region30: #{tpu_custom_call.1} parent=1 // pred_check
      _
    $region31: #{tpu_custom_call.1} parent=1 // pred_check_branch
      %80 = sbr.rel (0) target = $region33
    $region32: #{tpu_custom_call.1} parent=1 // pred_region
      %82 = dma.done [#allocation6], 512
    $region33: #{tpu_custom_call.1} parent=1 // pred_fallthru
      _
    // Predicated region
    $region34: #{tpu_custom_call.1} parent=1 // pred_check
      _
    $region35: #{tpu_custom_call.1} parent=1 // pred_check_branch
      %84 = sbr.rel (0) target = $region37
    $region36: #{tpu_custom_call.1} parent=1 // pred_region
      %86 = dma.done [#allocation9], 512
    $region37: #{tpu_custom_call.1} parent=1 // pred_fallthru
      _
    %v87 = vld [vmem:[#allocation2] sm:$0xff]
    %v88 = vld [vmem:[#allocation2 + $0x8] sm:$0xff]
    %v89 = vld [vmem:[#allocation5] sm:$0xff]
    %v90 = vld [vmem:[#allocation5 + $0x8] sm:$0xff]
    %v91 = vld [vmem:[#allocation5 + $0x10] sm:$0xff]
    %v92 = vld [vmem:[#allocation5 + $0x18] sm:$0xff]
    %vm93 = vcmask 261120
    %v95 = vsel %vm93, %v87, 0
    %v98 = vsel %vm93, %v89, 0
    %v101 = vsel %vm93, %v90, 0
    %103 = vmatpush.xpose.msra.mxu0 0.0
    %104 = vmatpush.xpose.msra.mxu0 0.0
    %105 = vmatpush.xpose.msra.mxu0 0.0
    %106 = vmatpush.xpose.msra.mxu0 0.0
    %107 = vmatpush.xpose.msra.mxu0 0.0
    %108 = vmatpush.xpose.msra.mxu0 0.0
    %109 = vmatpush.xpose.msra.mxu0 0.0
    %110 = vmatpush.xpose.msra.mxu0 0.0
    %111 = vmatpush.xpose.msra.mxu0 0.0
    %112 = vmatpush.xpose.msra.mxu0 0.0
    %113 = vmatpush.xpose.msra.mxu0 0.0
    %114 = vmatpush.xpose.msra.mxu0 0.0
    %115 = vmatpush.xpose.msra.mxu0 0.0
    %116 = vmatpush.xpose.msra.mxu0 0.0
    %v117 = vand.u32 %v101, 4294901760
    %118 = vmatpush.xpose.msra.mxu0 %v117
    %v119 = vand.u32 %v98, 4294901760
    %120 = vmatpush.xpose.msra.mxu0 %v119
    %v121 = vand.u32 %v95, 4294901760
    %v122 = vsub.f32 %v95, %v121
    %v123 = vand.u32 %v122, 4294901760
    %v124 = vsub.f32 %v122, %v123
    %v125 = vand.u32 %v124, 4294901760
    %126 = vmatmul.f32.gmra.mxu0 %v125
    %v127 = vpop.f32.mrf.mxu0
    %v128 = vadd.f32 0.0, %v127
    %129 = vdwg.mxu0
    %130 = vmatpush.xpose.msra.mxu0 0.0
    %131 = vmatpush.xpose.msra.mxu0 0.0
    %132 = vmatpush.xpose.msra.mxu0 0.0
    %133 = vmatpush.xpose.msra.mxu0 0.0
    %134 = vmatpush.xpose.msra.mxu0 0.0
    %135 = vmatpush.xpose.msra.mxu0 0.0
    %136 = vmatpush.xpose.msra.mxu0 0.0
    %137 = vmatpush.xpose.msra.mxu0 0.0
    %138 = vmatpush.xpose.msra.mxu0 0.0
    %139 = vmatpush.xpose.msra.mxu0 0.0
    %140 = vmatpush.xpose.msra.mxu0 0.0
    %141 = vmatpush.xpose.msra.mxu0 0.0
    %142 = vmatpush.xpose.msra.mxu0 0.0
    %143 = vmatpush.xpose.msra.mxu0 0.0
    %v144 = vand.u32 %v101, 4294901760
    %v145 = vsub.f32 %v101, %v144
    %v146 = vand.u32 %v145, 4294901760
    %v147 = vsub.f32 %v145, %v146
    %v148 = vand.u32 %v147, 4294901760
    %149 = vmatpush.xpose.msra.mxu0 %v148
    %v150 = vand.u32 %v98, 4294901760
    %v151 = vsub.f32 %v98, %v150
    %v152 = vand.u32 %v151, 4294901760
    %v153 = vsub.f32 %v151, %v152
    %v154 = vand.u32 %v153, 4294901760
    %155 = vmatpush.xpose.msra.mxu0 %v154
    %v156 = vand.u32 %v95, 4294901760
    %157 = vmatmul.f32.gmra.mxu0 %v156
    %v158 = vpop.f32.mrf.mxu0
    %v159 = vadd.f32 %v128, %v158
    %160 = vdwg.mxu0
    %161 = vmatpush.xpose.msra.mxu0 0.0
    %162 = vmatpush.xpose.msra.mxu0 0.0
    %163 = vmatpush.xpose.msra.mxu0 0.0
    %164 = vmatpush.xpose.msra.mxu0 0.0
    %165 = vmatpush.xpose.msra.mxu0 0.0
    %166 = vmatpush.xpose.msra.mxu0 0.0
    %167 = vmatpush.xpose.msra.mxu0 0.0
    %168 = vmatpush.xpose.msra.mxu0 0.0
    %169 = vmatpush.xpose.msra.mxu0 0.0
    %170 = vmatpush.xpose.msra.mxu0 0.0
    %171 = vmatpush.xpose.msra.mxu0 0.0
    %172 = vmatpush.xpose.msra.mxu0 0.0
    %173 = vmatpush.xpose.msra.mxu0 0.0
    %174 = vmatpush.xpose.msra.mxu0 0.0
    %v175 = vand.u32 %v101, 4294901760
    %v176 = vsub.f32 %v101, %v175
    %177 = vmatpush.xpose.msra.mxu0 %v176
    %v178 = vand.u32 %v98, 4294901760
    %v179 = vsub.f32 %v98, %v178
    %180 = vmatpush.xpose.msra.mxu0 %v179
    %v181 = vand.u32 %v95, 4294901760
    %v182 = vsub.f32 %v95, %v181
    %183 = vmatmul.f32.gmra.mxu0 %v182
    %v184 = vpop.f32.mrf.mxu0
    %v185 = vadd.f32 %v159, %v184
    %186 = vdwg.mxu0
    %187 = vmatpush.xpose.msra.mxu0 0.0
    %188 = vmatpush.xpose.msra.mxu0 0.0
    %189 = vmatpush.xpose.msra.mxu0 0.0
    %190 = vmatpush.xpose.msra.mxu0 0.0
    %191 = vmatpush.xpose.msra.mxu0 0.0
    %192 = vmatpush.xpose.msra.mxu0 0.0
    %193 = vmatpush.xpose.msra.mxu0 0.0
    %194 = vmatpush.xpose.msra.mxu0 0.0
    %195 = vmatpush.xpose.msra.mxu0 0.0
    %196 = vmatpush.xpose.msra.mxu0 0.0
    %197 = vmatpush.xpose.msra.mxu0 0.0
    %198 = vmatpush.xpose.msra.mxu0 0.0
    %199 = vmatpush.xpose.msra.mxu0 0.0
    %200 = vmatpush.xpose.msra.mxu0 0.0
    %v201 = vand.u32 %v101, 4294901760
    %202 = vmatpush.xpose.msra.mxu0 %v201
    %v203 = vand.u32 %v98, 4294901760
    %204 = vmatpush.xpose.msra.mxu0 %v203
    %v205 = vand.u32 %v95, 4294901760
    %v206 = vsub.f32 %v95, %v205
    %v207 = vand.u32 %v206, 4294901760
    %208 = vmatmul.f32.gmra.mxu0 %v207
    %v209 = vpop.f32.mrf.mxu0
    %v210 = vadd.f32 %v185, %v209
    %211 = vdwg.mxu0
    %212 = vmatpush.xpose.msra.mxu0 0.0
    %213 = vmatpush.xpose.msra.mxu0 0.0
    %214 = vmatpush.xpose.msra.mxu0 0.0
    %215 = vmatpush.xpose.msra.mxu0 0.0
    %216 = vmatpush.xpose.msra.mxu0 0.0
    %217 = vmatpush.xpose.msra.mxu0 0.0
    %218 = vmatpush.xpose.msra.mxu0 0.0
    %219 = vmatpush.xpose.msra.mxu0 0.0
    %220 = vmatpush.xpose.msra.mxu0 0.0
    %221 = vmatpush.xpose.msra.mxu0 0.0
    %222 = vmatpush.xpose.msra.mxu0 0.0
    %223 = vmatpush.xpose.msra.mxu0 0.0
    %224 = vmatpush.xpose.msra.mxu0 0.0
    %225 = vmatpush.xpose.msra.mxu0 0.0
    %v226 = vand.u32 %v101, 4294901760
    %v227 = vsub.f32 %v101, %v226
    %v228 = vand.u32 %v227, 4294901760
    %229 = vmatpush.xpose.msra.mxu0 %v228
    %v230 = vand.u32 %v98, 4294901760
    %v231 = vsub.f32 %v98, %v230
    %v232 = vand.u32 %v231, 4294901760
    %233 = vmatpush.xpose.msra.mxu0 %v232
    %v234 = vand.u32 %v95, 4294901760
    %235 = vmatmul.f32.gmra.mxu0 %v234
    %v236 = vpop.f32.mrf.mxu0
    %v237 = vadd.f32 %v210, %v236
    %238 = vdwg.mxu0
    %239 = vmatpush.xpose.msra.mxu0 0.0
    %240 = vmatpush.xpose.msra.mxu0 0.0
    %241 = vmatpush.xpose.msra.mxu0 0.0
    %242 = vmatpush.xpose.msra.mxu0 0.0
    %243 = vmatpush.xpose.msra.mxu0 0.0
    %244 = vmatpush.xpose.msra.mxu0 0.0
    %245 = vmatpush.xpose.msra.mxu0 0.0
    %246 = vmatpush.xpose.msra.mxu0 0.0
    %247 = vmatpush.xpose.msra.mxu0 0.0
    %248 = vmatpush.xpose.msra.mxu0 0.0
    %249 = vmatpush.xpose.msra.mxu0 0.0
    %250 = vmatpush.xpose.msra.mxu0 0.0
    %251 = vmatpush.xpose.msra.mxu0 0.0
    %252 = vmatpush.xpose.msra.mxu0 0.0
    %v253 = vand.u32 %v101, 4294901760
    %254 = vmatpush.xpose.msra.mxu0 %v253
    %v255 = vand.u32 %v98, 4294901760
    %256 = vmatpush.xpose.msra.mxu0 %v255
    %v257 = vand.u32 %v95, 4294901760
    %258 = vmatmul.f32.gmra.mxu0 %v257
    %v259 = vpop.f32.mrf.mxu0
    %v260 = vadd.f32 %v237, %v259
    %261 = vdwg.mxu0
    %v263 = vsel %vm93, %v88, 0
    %v266 = vsel %vm93, %v91, 0
    %v269 = vsel %vm93, %v92, 0
    %271 = vmatpush.xpose.msra.mxu0 0.0
    %272 = vmatpush.xpose.msra.mxu0 0.0
    %273 = vmatpush.xpose.msra.mxu0 0.0
    %274 = vmatpush.xpose.msra.mxu0 0.0
    %275 = vmatpush.xpose.msra.mxu0 0.0
    %276 = vmatpush.xpose.msra.mxu0 0.0
    %277 = vmatpush.xpose.msra.mxu0 0.0
    %278 = vmatpush.xpose.msra.mxu0 0.0
    %279 = vmatpush.xpose.msra.mxu0 0.0
    %280 = vmatpush.xpose.msra.mxu0 0.0
    %281 = vmatpush.xpose.msra.mxu0 0.0
    %282 = vmatpush.xpose.msra.mxu0 0.0
    %283 = vmatpush.xpose.msra.mxu0 0.0
    %284 = vmatpush.xpose.msra.mxu0 0.0
    %v285 = vand.u32 %v269, 4294901760
    %286 = vmatpush.xpose.msra.mxu0 %v285
    %v287 = vand.u32 %v266, 4294901760
    %288 = vmatpush.xpose.msra.mxu0 %v287
    %v289 = vand.u32 %v263, 4294901760
    %v290 = vsub.f32 %v263, %v289
    %v291 = vand.u32 %v290, 4294901760
    %v292 = vsub.f32 %v290, %v291
    %v293 = vand.u32 %v292, 4294901760
    %294 = vmatmul.f32.gmra.mxu0 %v293
    %v295 = vpop.f32.mrf.mxu0
    %v296 = vadd.f32 0.0, %v295
    %297 = vdwg.mxu0
    %298 = vmatpush.xpose.msra.mxu0 0.0
    %299 = vmatpush.xpose.msra.mxu0 0.0
    %300 = vmatpush.xpose.msra.mxu0 0.0
    %301 = vmatpush.xpose.msra.mxu0 0.0
    %302 = vmatpush.xpose.msra.mxu0 0.0
    %303 = vmatpush.xpose.msra.mxu0 0.0
    %304 = vmatpush.xpose.msra.mxu0 0.0
    %305 = vmatpush.xpose.msra.mxu0 0.0
    %306 = vmatpush.xpose.msra.mxu0 0.0
    %307 = vmatpush.xpose.msra.mxu0 0.0
    %308 = vmatpush.xpose.msra.mxu0 0.0
    %309 = vmatpush.xpose.msra.mxu0 0.0
    %310 = vmatpush.xpose.msra.mxu0 0.0
    %311 = vmatpush.xpose.msra.mxu0 0.0
    %v312 = vand.u32 %v269, 4294901760
    %v313 = vsub.f32 %v269, %v312
    %v314 = vand.u32 %v313, 4294901760
    %v315 = vsub.f32 %v313, %v314
    %v316 = vand.u32 %v315, 4294901760
    %317 = vmatpush.xpose.msra.mxu0 %v316
    %v318 = vand.u32 %v266, 4294901760
    %v319 = vsub.f32 %v266, %v318
    %v320 = vand.u32 %v319, 4294901760
    %v321 = vsub.f32 %v319, %v320
    %v322 = vand.u32 %v321, 4294901760
    %323 = vmatpush.xpose.msra.mxu0 %v322
    %v324 = vand.u32 %v263, 4294901760
    %325 = vmatmul.f32.gmra.mxu0 %v324
    %v326 = vpop.f32.mrf.mxu0
    %v327 = vadd.f32 %v296, %v326
    %328 = vdwg.mxu0
    %329 = vmatpush.xpose.msra.mxu0 0.0
    %330 = vmatpush.xpose.msra.mxu0 0.0
    %331 = vmatpush.xpose.msra.mxu0 0.0
    %332 = vmatpush.xpose.msra.mxu0 0.0
    %333 = vmatpush.xpose.msra.mxu0 0.0
    %334 = vmatpush.xpose.msra.mxu0 0.0
    %335 = vmatpush.xpose.msra.mxu0 0.0
    %336 = vmatpush.xpose.msra.mxu0 0.0
    %337 = vmatpush.xpose.msra.mxu0 0.0
    %338 = vmatpush.xpose.msra.mxu0 0.0
    %339 = vmatpush.xpose.msra.mxu0 0.0
    %340 = vmatpush.xpose.msra.mxu0 0.0
    %341 = vmatpush.xpose.msra.mxu0 0.0
    %342 = vmatpush.xpose.msra.mxu0 0.0
    %v343 = vand.u32 %v269, 4294901760
    %v344 = vsub.f32 %v269, %v343
    %345 = vmatpush.xpose.msra.mxu0 %v344
    %v346 = vand.u32 %v266, 4294901760
    %v347 = vsub.f32 %v266, %v346
    %348 = vmatpush.xpose.msra.mxu0 %v347
    %v349 = vand.u32 %v263, 4294901760
    %v350 = vsub.f32 %v263, %v349
    %351 = vmatmul.f32.gmra.mxu0 %v350
    %v352 = vpop.f32.mrf.mxu0
    %v353 = vadd.f32 %v327, %v352
    %354 = vdwg.mxu0
    %355 = vmatpush.xpose.msra.mxu0 0.0
    %356 = vmatpush.xpose.msra.mxu0 0.0
    %357 = vmatpush.xpose.msra.mxu0 0.0
    %358 = vmatpush.xpose.msra.mxu0 0.0
    %359 = vmatpush.xpose.msra.mxu0 0.0
    %360 = vmatpush.xpose.msra.mxu0 0.0
    %361 = vmatpush.xpose.msra.mxu0 0.0
    %362 = vmatpush.xpose.msra.mxu0 0.0
    %363 = vmatpush.xpose.msra.mxu0 0.0
    %364 = vmatpush.xpose.msra.mxu0 0.0
    %365 = vmatpush.xpose.msra.mxu0 0.0
    %366 = vmatpush.xpose.msra.mxu0 0.0
    %367 = vmatpush.xpose.msra.mxu0 0.0
    %368 = vmatpush.xpose.msra.mxu0 0.0
    %v369 = vand.u32 %v269, 4294901760
    %370 = vmatpush.xpose.msra.mxu0 %v369
    %v371 = vand.u32 %v266, 4294901760
    %372 = vmatpush.xpose.msra.mxu0 %v371
    %v373 = vand.u32 %v263, 4294901760
    %v374 = vsub.f32 %v263, %v373
    %v375 = vand.u32 %v374, 4294901760
    %376 = vmatmul.f32.gmra.mxu0 %v375
    %v377 = vpop.f32.mrf.mxu0
    %v378 = vadd.f32 %v353, %v377
    %379 = vdwg.mxu0
    %380 = vmatpush.xpose.msra.mxu0 0.0
    %381 = vmatpush.xpose.msra.mxu0 0.0
    %382 = vmatpush.xpose.msra.mxu0 0.0
    %383 = vmatpush.xpose.msra.mxu0 0.0
    %384 = vmatpush.xpose.msra.mxu0 0.0
    %385 = vmatpush.xpose.msra.mxu0 0.0
    %386 = vmatpush.xpose.msra.mxu0 0.0
    %387 = vmatpush.xpose.msra.mxu0 0.0
    %388 = vmatpush.xpose.msra.mxu0 0.0
    %389 = vmatpush.xpose.msra.mxu0 0.0
    %390 = vmatpush.xpose.msra.mxu0 0.0
    %391 = vmatpush.xpose.msra.mxu0 0.0
    %392 = vmatpush.xpose.msra.mxu0 0.0
    %393 = vmatpush.xpose.msra.mxu0 0.0
    %v394 = vand.u32 %v269, 4294901760
    %v395 = vsub.f32 %v269, %v394
    %v396 = vand.u32 %v395, 4294901760
    %397 = vmatpush.xpose.msra.mxu0 %v396
    %v398 = vand.u32 %v266, 4294901760
    %v399 = vsub.f32 %v266, %v398
    %v400 = vand.u32 %v399, 4294901760
    %401 = vmatpush.xpose.msra.mxu0 %v400
    %v402 = vand.u32 %v263, 4294901760
    %403 = vmatmul.f32.gmra.mxu0 %v402
    %v404 = vpop.f32.mrf.mxu0
    %v405 = vadd.f32 %v378, %v404
    %406 = vdwg.mxu0
    %407 = vmatpush.xpose.msra.mxu0 0.0
    %408 = vmatpush.xpose.msra.mxu0 0.0
    %409 = vmatpush.xpose.msra.mxu0 0.0
    %410 = vmatpush.xpose.msra.mxu0 0.0
    %411 = vmatpush.xpose.msra.mxu0 0.0
    %412 = vmatpush.xpose.msra.mxu0 0.0
    %413 = vmatpush.xpose.msra.mxu0 0.0
    %414 = vmatpush.xpose.msra.mxu0 0.0
    %415 = vmatpush.xpose.msra.mxu0 0.0
    %416 = vmatpush.xpose.msra.mxu0 0.0
    %417 = vmatpush.xpose.msra.mxu0 0.0
    %418 = vmatpush.xpose.msra.mxu0 0.0
    %419 = vmatpush.xpose.msra.mxu0 0.0
    %420 = vmatpush.xpose.msra.mxu0 0.0
    %v421 = vand.u32 %v269, 4294901760
    %422 = vmatpush.xpose.msra.mxu0 %v421
    %v423 = vand.u32 %v266, 4294901760
    %424 = vmatpush.xpose.msra.mxu0 %v423
    %v425 = vand.u32 %v263, 4294901760
    %426 = vmatmul.f32.gmra.mxu0 %v425
    %v427 = vpop.f32.mrf.mxu0
    %v428 = vadd.f32 %v405, %v427
    %429 = vdwg.mxu0
    %vm430 = vcmask 130048
    %v431 = vsel %vm430, %v260, -inf
    %432 = vmax.xlane.f32.xlu0 %v431
    %v433 = vpop.xlane.xlu0 %432
    %v434 = vsel %vm430, %v428, -inf
    %435 = vmax.xlane.f32.xlu0 %v434
    %v436 = vpop.xlane.xlu0 %435
    %v437 = vsub.f32 %v260, %v433
    %v438 = vsub.f32 %v428, %v436
    %v439 = vmul.f32 %v437, 1.442695
    %v440 = vpow.pop %v439
    %v441 = vmul.f32 %v438, 1.442695
    %v442 = vpow.pop %v441
    %v443 = vsel %vm430, %v440, 0.0
    %444 = vadd.xlane.f32.xlu0 %v443
    %v445 = vpop.xlane.xlu0 %444
    %v446 = vsel %vm430, %v442, 0.0
    %447 = vadd.xlane.f32.xlu0 %v446
    %v448 = vpop.xlane.xlu0 %447
    %v449 = vrcp.pop %v445
    %v450 = vmul.f32 %v445, %v449
    %v451 = vsub.f32 1.0, %v450
    %v452 = vmul.f32 %v449, %v451
    %v453 = vadd.f32 %v449, %v452
    %vm454 = vweird.f32 %v445
    %vm455 = vweird.f32 %v449
    %vm456 = vmor %vm454, %vm455
    %v457 = vsel %vm456, %v449, %v453
    %v458 = vand.u32 2147483647, %v445
    %vm459 = vcmp.eq.f32.partialorder %v458, 8.507059e+37
    %v460 = vand.u32 %v445, 2147483648
    %v461 = vor.u32 1.1754944e-38, %v460
    %v462 = vsel %vm459, %v461, %v457
    %v463 = vmul.f32 %v440, %v462
    %v464 = vrcp.pop %v448
    %v465 = vmul.f32 %v448, %v464
    %v466 = vsub.f32 1.0, %v465
    %v467 = vmul.f32 %v464, %v466
    %v468 = vadd.f32 %v464, %v467
    %vm469 = vweird.f32 %v448
    %vm470 = vweird.f32 %v464
    %vm471 = vmor %vm469, %vm470
    %v472 = vsel %vm471, %v464, %v468
    %v473 = vand.u32 2147483647, %v448
    %vm474 = vcmp.eq.f32.partialorder %v473, 8.507059e+37
    %v475 = vand.u32 %v448, 2147483648
    %v476 = vor.u32 1.1754944e-38, %v475
    %v477 = vsel %vm474, %v476, %v472
    %v478 = vmul.f32 %v442, %v477
    %479 = vst.msk [vmem:[#allocation11] sm:$0xff] %vm430, %v463
    %480 = vst.msk [vmem:[#allocation11 + $0x8] sm:$0xff] %vm430, %v478
    %v482 = vsel %vm430, %v463, 0
    %484 = vmatpush.msra.mxu0 0.0
    %485 = vmatpush.msra.mxu0 0.0
    %486 = vmatpush.msra.mxu0 0.0
    %487 = vmatpush.msra.mxu0 0.0
    %488 = vmatpush.msra.mxu0 0.0
    %489 = vmatpush.msra.mxu0 0.0
    %490 = vmatpush.msra.mxu0 0.0
    %491 = vmatpush.msra.mxu0 0.0
    %492 = vmatpush.msra.mxu0 0.0
    %493 = vmatpush.msra.mxu0 0.0
    %494 = vmatpush.msra.mxu0 0.0
    %495 = vmatpush.msra.mxu0 0.0
    %496 = vmatpush.msra.mxu0 0.0
    %497 = vmatpush.msra.mxu0 0.0
    %v498 = vand.u32 %v90, 4294901760
    %499 = vmatpush.msra.mxu0 %v498
    %v500 = vand.u32 %v89, 4294901760
    %501 = vmatpush.msra.mxu0 %v500
    %v502 = vand.u32 %v482, 4294901760
    %v503 = vsub.f32 %v482, %v502
    %v504 = vand.u32 %v503, 4294901760
    %v505 = vsub.f32 %v503, %v504
    %v506 = vand.u32 %v505, 4294901760
    %507 = vmatmul.f32.gmra.mxu0 %v506
    %v508 = vpop.f32.mrf.mxu0
    %v509 = vadd.f32 0.0, %v508
    %510 = vdwg.mxu0
    %511 = vmatpush.msra.mxu0 0.0
    %512 = vmatpush.msra.mxu0 0.0
    %513 = vmatpush.msra.mxu0 0.0
    %514 = vmatpush.msra.mxu0 0.0
    %515 = vmatpush.msra.mxu0 0.0
    %516 = vmatpush.msra.mxu0 0.0
    %517 = vmatpush.msra.mxu0 0.0
    %518 = vmatpush.msra.mxu0 0.0
    %519 = vmatpush.msra.mxu0 0.0
    %520 = vmatpush.msra.mxu0 0.0
    %521 = vmatpush.msra.mxu0 0.0
    %522 = vmatpush.msra.mxu0 0.0
    %523 = vmatpush.msra.mxu0 0.0
    %524 = vmatpush.msra.mxu0 0.0
    %v525 = vand.u32 %v90, 4294901760
    %v526 = vsub.f32 %v90, %v525
    %v527 = vand.u32 %v526, 4294901760
    %v528 = vsub.f32 %v526, %v527
    %v529 = vand.u32 %v528, 4294901760
    %530 = vmatpush.msra.mxu0 %v529
    %v531 = vand.u32 %v89, 4294901760
    %v532 = vsub.f32 %v89, %v531
    %v533 = vand.u32 %v532, 4294901760
    %v534 = vsub.f32 %v532, %v533
    %v535 = vand.u32 %v534, 4294901760
    %536 = vmatpush.msra.mxu0 %v535
    %v537 = vand.u32 %v482, 4294901760
    %538 = vmatmul.f32.gmra.mxu0 %v537
    %v539 = vpop.f32.mrf.mxu0
    %v540 = vadd.f32 %v509, %v539
    %541 = vdwg.mxu0
    %542 = vmatpush.msra.mxu0 0.0
    %543 = vmatpush.msra.mxu0 0.0
    %544 = vmatpush.msra.mxu0 0.0
    %545 = vmatpush.msra.mxu0 0.0
    %546 = vmatpush.msra.mxu0 0.0
    %547 = vmatpush.msra.mxu0 0.0
    %548 = vmatpush.msra.mxu0 0.0
    %549 = vmatpush.msra.mxu0 0.0
    %550 = vmatpush.msra.mxu0 0.0
    %551 = vmatpush.msra.mxu0 0.0
    %552 = vmatpush.msra.mxu0 0.0
    %553 = vmatpush.msra.mxu0 0.0
    %554 = vmatpush.msra.mxu0 0.0
    %555 = vmatpush.msra.mxu0 0.0
    %v556 = vand.u32 %v90, 4294901760
    %v557 = vsub.f32 %v90, %v556
    %558 = vmatpush.msra.mxu0 %v557
    %v559 = vand.u32 %v89, 4294901760
    %v560 = vsub.f32 %v89, %v559
    %561 = vmatpush.msra.mxu0 %v560
    %v562 = vand.u32 %v482, 4294901760
    %v563 = vsub.f32 %v482, %v562
    %564 = vmatmul.f32.gmra.mxu0 %v563
    %v565 = vpop.f32.mrf.mxu0
    %v566 = vadd.f32 %v540, %v565
    %567 = vdwg.mxu0
    %568 = vmatpush.msra.mxu0 0.0
    %569 = vmatpush.msra.mxu0 0.0
    %570 = vmatpush.msra.mxu0 0.0
    %571 = vmatpush.msra.mxu0 0.0
    %572 = vmatpush.msra.mxu0 0.0
    %573 = vmatpush.msra.mxu0 0.0
    %574 = vmatpush.msra.mxu0 0.0
    %575 = vmatpush.msra.mxu0 0.0
    %576 = vmatpush.msra.mxu0 0.0
    %577 = vmatpush.msra.mxu0 0.0
    %578 = vmatpush.msra.mxu0 0.0
    %579 = vmatpush.msra.mxu0 0.0
    %580 = vmatpush.msra.mxu0 0.0
    %581 = vmatpush.msra.mxu0 0.0
    %v582 = vand.u32 %v90, 4294901760
    %583 = vmatpush.msra.mxu0 %v582
    %v584 = vand.u32 %v89, 4294901760
    %585 = vmatpush.msra.mxu0 %v584
    %v586 = vand.u32 %v482, 4294901760
    %v587 = vsub.f32 %v482, %v586
    %v588 = vand.u32 %v587, 4294901760
    %589 = vmatmul.f32.gmra.mxu0 %v588
    %v590 = vpop.f32.mrf.mxu0
    %v591 = vadd.f32 %v566, %v590
    %592 = vdwg.mxu0
    %593 = vmatpush.msra.mxu0 0.0
    %594 = vmatpush.msra.mxu0 0.0
    %595 = vmatpush.msra.mxu0 0.0
    %596 = vmatpush.msra.mxu0 0.0
    %597 = vmatpush.msra.mxu0 0.0
    %598 = vmatpush.msra.mxu0 0.0
    %599 = vmatpush.msra.mxu0 0.0
    %600 = vmatpush.msra.mxu0 0.0
    %601 = vmatpush.msra.mxu0 0.0
    %602 = vmatpush.msra.mxu0 0.0
    %603 = vmatpush.msra.mxu0 0.0
    %604 = vmatpush.msra.mxu0 0.0
    %605 = vmatpush.msra.mxu0 0.0
    %606 = vmatpush.msra.mxu0 0.0
    %v607 = vand.u32 %v90, 4294901760
    %v608 = vsub.f32 %v90, %v607
    %v609 = vand.u32 %v608, 4294901760
    %610 = vmatpush.msra.mxu0 %v609
    %v611 = vand.u32 %v89, 4294901760
    %v612 = vsub.f32 %v89, %v611
    %v613 = vand.u32 %v612, 4294901760
    %614 = vmatpush.msra.mxu0 %v613
    %v615 = vand.u32 %v482, 4294901760
    %616 = vmatmul.f32.gmra.mxu0 %v615
    %v617 = vpop.f32.mrf.mxu0
    %v618 = vadd.f32 %v591, %v617
    %619 = vdwg.mxu0
    %620 = vmatpush.msra.mxu0 0.0
    %621 = vmatpush.msra.mxu0 0.0
    %622 = vmatpush.msra.mxu0 0.0
    %623 = vmatpush.msra.mxu0 0.0
    %624 = vmatpush.msra.mxu0 0.0
    %625 = vmatpush.msra.mxu0 0.0
    %626 = vmatpush.msra.mxu0 0.0
    %627 = vmatpush.msra.mxu0 0.0
    %628 = vmatpush.msra.mxu0 0.0
    %629 = vmatpush.msra.mxu0 0.0
    %630 = vmatpush.msra.mxu0 0.0
    %631 = vmatpush.msra.mxu0 0.0
    %632 = vmatpush.msra.mxu0 0.0
    %633 = vmatpush.msra.mxu0 0.0
    %v634 = vand.u32 %v90, 4294901760
    %635 = vmatpush.msra.mxu0 %v634
    %v636 = vand.u32 %v89, 4294901760
    %637 = vmatpush.msra.mxu0 %v636
    %v638 = vand.u32 %v482, 4294901760
    %639 = vmatmul.f32.gmra.mxu0 %v638
    %v640 = vpop.f32.mrf.mxu0
    %v641 = vadd.f32 %v618, %v640
    %642 = vdwg.mxu0
    %v644 = vsel %vm430, %v478, 0
    %646 = vmatpush.msra.mxu0 0.0
    %647 = vmatpush.msra.mxu0 0.0
    %648 = vmatpush.msra.mxu0 0.0
    %649 = vmatpush.msra.mxu0 0.0
    %650 = vmatpush.msra.mxu0 0.0
    %651 = vmatpush.msra.mxu0 0.0
    %652 = vmatpush.msra.mxu0 0.0
    %653 = vmatpush.msra.mxu0 0.0
    %654 = vmatpush.msra.mxu0 0.0
    %655 = vmatpush.msra.mxu0 0.0
    %656 = vmatpush.msra.mxu0 0.0
    %657 = vmatpush.msra.mxu0 0.0
    %658 = vmatpush.msra.mxu0 0.0
    %659 = vmatpush.msra.mxu0 0.0
    %v660 = vand.u32 %v92, 4294901760
    %661 = vmatpush.msra.mxu0 %v660
    %v662 = vand.u32 %v91, 4294901760
    %663 = vmatpush.msra.mxu0 %v662
    %v664 = vand.u32 %v644, 4294901760
    %v665 = vsub.f32 %v644, %v664
    %v666 = vand.u32 %v665, 4294901760
    %v667 = vsub.f32 %v665, %v666
    %v668 = vand.u32 %v667, 4294901760
    %669 = vmatmul.f32.gmra.mxu0 %v668
    %v670 = vpop.f32.mrf.mxu0
    %v671 = vadd.f32 0.0, %v670
    %672 = vdwg.mxu0
    %673 = vmatpush.msra.mxu0 0.0
    %674 = vmatpush.msra.mxu0 0.0
    %675 = vmatpush.msra.mxu0 0.0
    %676 = vmatpush.msra.mxu0 0.0
    %677 = vmatpush.msra.mxu0 0.0
    %678 = vmatpush.msra.mxu0 0.0
    %679 = vmatpush.msra.mxu0 0.0
    %680 = vmatpush.msra.mxu0 0.0
    %681 = vmatpush.msra.mxu0 0.0
    %682 = vmatpush.msra.mxu0 0.0
    %683 = vmatpush.msra.mxu0 0.0
    %684 = vmatpush.msra.mxu0 0.0
    %685 = vmatpush.msra.mxu0 0.0
    %686 = vmatpush.msra.mxu0 0.0
    %v687 = vand.u32 %v92, 4294901760
    %v688 = vsub.f32 %v92, %v687
    %v689 = vand.u32 %v688, 4294901760
    %v690 = vsub.f32 %v688, %v689
    %v691 = vand.u32 %v690, 4294901760
    %692 = vmatpush.msra.mxu0 %v691
    %v693 = vand.u32 %v91, 4294901760
    %v694 = vsub.f32 %v91, %v693
    %v695 = vand.u32 %v694, 4294901760
    %v696 = vsub.f32 %v694, %v695
    %v697 = vand.u32 %v696, 4294901760
    %698 = vmatpush.msra.mxu0 %v697
    %v699 = vand.u32 %v644, 4294901760
    %700 = vmatmul.f32.gmra.mxu0 %v699
    %v701 = vpop.f32.mrf.mxu0
    %v702 = vadd.f32 %v671, %v701
    %703 = vdwg.mxu0
    %704 = vmatpush.msra.mxu0 0.0
    %705 = vmatpush.msra.mxu0 0.0
    %706 = vmatpush.msra.mxu0 0.0
    %707 = vmatpush.msra.mxu0 0.0
    %708 = vmatpush.msra.mxu0 0.0
    %709 = vmatpush.msra.mxu0 0.0
    %710 = vmatpush.msra.mxu0 0.0
    %711 = vmatpush.msra.mxu0 0.0
    %712 = vmatpush.msra.mxu0 0.0
    %713 = vmatpush.msra.mxu0 0.0
    %714 = vmatpush.msra.mxu0 0.0
    %715 = vmatpush.msra.mxu0 0.0
    %716 = vmatpush.msra.mxu0 0.0
    %717 = vmatpush.msra.mxu0 0.0
    %v718 = vand.u32 %v92, 4294901760
    %v719 = vsub.f32 %v92, %v718
    %720 = vmatpush.msra.mxu0 %v719
    %v721 = vand.u32 %v91, 4294901760
    %v722 = vsub.f32 %v91, %v721
    %723 = vmatpush.msra.mxu0 %v722
    %v724 = vand.u32 %v644, 4294901760
    %v725 = vsub.f32 %v644, %v724
    %726 = vmatmul.f32.gmra.mxu0 %v725
    %v727 = vpop.f32.mrf.mxu0
    %v728 = vadd.f32 %v702, %v727
    %729 = vdwg.mxu0
    %730 = vmatpush.msra.mxu0 0.0
    %731 = vmatpush.msra.mxu0 0.0
    %732 = vmatpush.msra.mxu0 0.0
    %733 = vmatpush.msra.mxu0 0.0
    %734 = vmatpush.msra.mxu0 0.0
    %735 = vmatpush.msra.mxu0 0.0
    %736 = vmatpush.msra.mxu0 0.0
    %737 = vmatpush.msra.mxu0 0.0
    %738 = vmatpush.msra.mxu0 0.0
    %739 = vmatpush.msra.mxu0 0.0
    %740 = vmatpush.msra.mxu0 0.0
    %741 = vmatpush.msra.mxu0 0.0
    %742 = vmatpush.msra.mxu0 0.0
    %743 = vmatpush.msra.mxu0 0.0
    %v744 = vand.u32 %v92, 4294901760
    %745 = vmatpush.msra.mxu0 %v744
    %v746 = vand.u32 %v91, 4294901760
    %747 = vmatpush.msra.mxu0 %v746
    %v748 = vand.u32 %v644, 4294901760
    %v749 = vsub.f32 %v644, %v748
    %v750 = vand.u32 %v749, 4294901760
    %751 = vmatmul.f32.gmra.mxu0 %v750
    %v752 = vpop.f32.mrf.mxu0
    %v753 = vadd.f32 %v728, %v752
    %754 = vdwg.mxu0
    %755 = vmatpush.msra.mxu0 0.0
    %756 = vmatpush.msra.mxu0 0.0
    %757 = vmatpush.msra.mxu0 0.0
    %758 = vmatpush.msra.mxu0 0.0
    %759 = vmatpush.msra.mxu0 0.0
    %760 = vmatpush.msra.mxu0 0.0
    %761 = vmatpush.msra.mxu0 0.0
    %762 = vmatpush.msra.mxu0 0.0
    %763 = vmatpush.msra.mxu0 0.0
    %764 = vmatpush.msra.mxu0 0.0
    %765 = vmatpush.msra.mxu0 0.0
    %766 = vmatpush.msra.mxu0 0.0
    %767 = vmatpush.msra.mxu0 0.0
    %768 = vmatpush.msra.mxu0 0.0
    %v769 = vand.u32 %v92, 4294901760
    %v770 = vsub.f32 %v92, %v769
    %v771 = vand.u32 %v770, 4294901760
    %772 = vmatpush.msra.mxu0 %v771
    %v773 = vand.u32 %v91, 4294901760
    %v774 = vsub.f32 %v91, %v773
    %v775 = vand.u32 %v774, 4294901760
    %776 = vmatpush.msra.mxu0 %v775
    %v777 = vand.u32 %v644, 4294901760
    %778 = vmatmul.f32.gmra.mxu0 %v777
    %v779 = vpop.f32.mrf.mxu0
    %v780 = vadd.f32 %v753, %v779
    %781 = vdwg.mxu0
    %782 = vmatpush.msra.mxu0 0.0
    %783 = vmatpush.msra.mxu0 0.0
    %784 = vmatpush.msra.mxu0 0.0
    %785 = vmatpush.msra.mxu0 0.0
    %786 = vmatpush.msra.mxu0 0.0
    %787 = vmatpush.msra.mxu0 0.0
    %788 = vmatpush.msra.mxu0 0.0
    %789 = vmatpush.msra.mxu0 0.0
    %790 = vmatpush.msra.mxu0 0.0
    %791 = vmatpush.msra.mxu0 0.0
    %792 = vmatpush.msra.mxu0 0.0
    %793 = vmatpush.msra.mxu0 0.0
    %794 = vmatpush.msra.mxu0 0.0
    %795 = vmatpush.msra.mxu0 0.0
    %v796 = vand.u32 %v92, 4294901760
    %797 = vmatpush.msra.mxu0 %v796
    %v798 = vand.u32 %v91, 4294901760
    %799 = vmatpush.msra.mxu0 %v798
    %v800 = vand.u32 %v644, 4294901760
    %801 = vmatmul.f32.gmra.mxu0 %v800
    %v802 = vpop.f32.mrf.mxu0
    %v803 = vadd.f32 %v780, %v802
    %804 = vdwg.mxu0
    %v805 = vld [vmem:[#allocation7] sm:$0xff]
    %v806 = vld [vmem:[#allocation7 + $0x8] sm:$0xff]
    %v807 = vld [vmem:[#allocation7 + $0x10] sm:$0xff]
    %v808 = vld [vmem:[#allocation7 + $0x18] sm:$0xff]
    %v809 = vld [vmem:[#allocation8] sm:$0xff]
    %v810 = vld [vmem:[#allocation8 + $0x8] sm:$0xff]
    %v811 = vld [vmem:[#allocation8 + $0x10] sm:$0xff]
    %v812 = vld [vmem:[#allocation8 + $0x18] sm:$0xff]
    %813 = vmatpush.msra.mxu0 0.0
    %814 = vmatpush.msra.mxu0 0.0
    %815 = vmatpush.msra.mxu0 0.0
    %816 = vmatpush.msra.mxu0 0.0
    %817 = vmatpush.msra.mxu0 0.0
    %818 = vmatpush.msra.mxu0 0.0
    %819 = vmatpush.msra.mxu0 0.0
    %820 = vmatpush.msra.mxu0 0.0
    %821 = vmatpush.msra.mxu0 0.0
    %822 = vmatpush.msra.mxu0 0.0
    %823 = vmatpush.msra.mxu0 0.0
    %824 = vmatpush.msra.mxu0 0.0
    %v825 = vand.u32 %v812, 4294901760
    %826 = vmatpush.msra.mxu0 %v825
    %v827 = vand.u32 %v811, 4294901760
    %828 = vmatpush.msra.mxu0 %v827
    %v829 = vand.u32 %v810, 4294901760
    %830 = vmatpush.msra.mxu0 %v829
    %v831 = vand.u32 %v809, 4294901760
    %832 = vmatpush.msra.mxu0 %v831
    %v833 = vand.u32 %v95, 4294901760
    %v834 = vsub.f32 %v95, %v833
    %v835 = vand.u32 %v834, 4294901760
    %v836 = vsub.f32 %v834, %v835
    %v837 = vand.u32 %v836, 4294901760
    %838 = vmatmul.f32.gmra.mxu0 %v837
    %v839 = vpop.f32.mrf.mxu0
    %v840 = vadd.f32 0.0, %v839
    %v841 = vand.u32 %v263, 4294901760
    %v842 = vsub.f32 %v263, %v841
    %v843 = vand.u32 %v842, 4294901760
    %v844 = vsub.f32 %v842, %v843
    %v845 = vand.u32 %v844, 4294901760
    %846 = vmatmul.f32.gmra.mxu0 %v845
    %v847 = vpop.f32.mrf.mxu0
    %v848 = vadd.f32 0.0, %v847
    %849 = vdwg.mxu0
    %850 = vmatpush.msra.mxu0 0.0
    %851 = vmatpush.msra.mxu0 0.0
    %852 = vmatpush.msra.mxu0 0.0
    %853 = vmatpush.msra.mxu0 0.0
    %854 = vmatpush.msra.mxu0 0.0
    %855 = vmatpush.msra.mxu0 0.0
    %856 = vmatpush.msra.mxu0 0.0
    %857 = vmatpush.msra.mxu0 0.0
    %858 = vmatpush.msra.mxu0 0.0
    %859 = vmatpush.msra.mxu0 0.0
    %860 = vmatpush.msra.mxu0 0.0
    %861 = vmatpush.msra.mxu0 0.0
    %v862 = vand.u32 %v812, 4294901760
    %v863 = vsub.f32 %v812, %v862
    %v864 = vand.u32 %v863, 4294901760
    %v865 = vsub.f32 %v863, %v864
    %v866 = vand.u32 %v865, 4294901760
    %867 = vmatpush.msra.mxu0 %v866
    %v868 = vand.u32 %v811, 4294901760
    %v869 = vsub.f32 %v811, %v868
    %v870 = vand.u32 %v869, 4294901760
    %v871 = vsub.f32 %v869, %v870
    %v872 = vand.u32 %v871, 4294901760
    %873 = vmatpush.msra.mxu0 %v872
    %v874 = vand.u32 %v810, 4294901760
    %v875 = vsub.f32 %v810, %v874
    %v876 = vand.u32 %v875, 4294901760
    %v877 = vsub.f32 %v875, %v876
    %v878 = vand.u32 %v877, 4294901760
    %879 = vmatpush.msra.mxu0 %v878
    %v880 = vand.u32 %v809, 4294901760
    %v881 = vsub.f32 %v809, %v880
    %v882 = vand.u32 %v881, 4294901760
    %v883 = vsub.f32 %v881, %v882
    %v884 = vand.u32 %v883, 4294901760
    %885 = vmatpush.msra.mxu0 %v884
    %v886 = vand.u32 %v95, 4294901760
    %887 = vmatmul.f32.gmra.mxu0 %v886
    %v888 = vpop.f32.mrf.mxu0
    %v889 = vadd.f32 %v840, %v888
    %v890 = vand.u32 %v263, 4294901760
    %891 = vmatmul.f32.gmra.mxu0 %v890
    %v892 = vpop.f32.mrf.mxu0
    %v893 = vadd.f32 %v848, %v892
    %894 = vdwg.mxu0
    %895 = vmatpush.msra.mxu0 0.0
    %896 = vmatpush.msra.mxu0 0.0
    %897 = vmatpush.msra.mxu0 0.0
    %898 = vmatpush.msra.mxu0 0.0
    %899 = vmatpush.msra.mxu0 0.0
    %900 = vmatpush.msra.mxu0 0.0
    %901 = vmatpush.msra.mxu0 0.0
    %902 = vmatpush.msra.mxu0 0.0
    %903 = vmatpush.msra.mxu0 0.0
    %904 = vmatpush.msra.mxu0 0.0
    %905 = vmatpush.msra.mxu0 0.0
    %906 = vmatpush.msra.mxu0 0.0
    %v907 = vand.u32 %v812, 4294901760
    %v908 = vsub.f32 %v812, %v907
    %909 = vmatpush.msra.mxu0 %v908
    %v910 = vand.u32 %v811, 4294901760
    %v911 = vsub.f32 %v811, %v910
    %912 = vmatpush.msra.mxu0 %v911
    %v913 = vand.u32 %v810, 4294901760
    %v914 = vsub.f32 %v810, %v913
    %915 = vmatpush.msra.mxu0 %v914
    %v916 = vand.u32 %v809, 4294901760
    %v917 = vsub.f32 %v809, %v916
    %918 = vmatpush.msra.mxu0 %v917
    %v919 = vand.u32 %v95, 4294901760
    %v920 = vsub.f32 %v95, %v919
    %921 = vmatmul.f32.gmra.mxu0 %v920
    %v922 = vpop.f32.mrf.mxu0
    %v923 = vadd.f32 %v889, %v922
    %v924 = vand.u32 %v263, 4294901760
    %v925 = vsub.f32 %v263, %v924
    %926 = vmatmul.f32.gmra.mxu0 %v925
    %v927 = vpop.f32.mrf.mxu0
    %v928 = vadd.f32 %v893, %v927
    %929 = vdwg.mxu0
    %930 = vmatpush.msra.mxu0 0.0
    %931 = vmatpush.msra.mxu0 0.0
    %932 = vmatpush.msra.mxu0 0.0
    %933 = vmatpush.msra.mxu0 0.0
    %934 = vmatpush.msra.mxu0 0.0
    %935 = vmatpush.msra.mxu0 0.0
    %936 = vmatpush.msra.mxu0 0.0
    %937 = vmatpush.msra.mxu0 0.0
    %938 = vmatpush.msra.mxu0 0.0
    %939 = vmatpush.msra.mxu0 0.0
    %940 = vmatpush.msra.mxu0 0.0
    %941 = vmatpush.msra.mxu0 0.0
    %v942 = vand.u32 %v812, 4294901760
    %943 = vmatpush.msra.mxu0 %v942
    %v944 = vand.u32 %v811, 4294901760
    %945 = vmatpush.msra.mxu0 %v944
    %v946 = vand.u32 %v810, 4294901760
    %947 = vmatpush.msra.mxu0 %v946
    %v948 = vand.u32 %v809, 4294901760
    %949 = vmatpush.msra.mxu0 %v948
    %v950 = vand.u32 %v95, 4294901760
    %v951 = vsub.f32 %v95, %v950
    %v952 = vand.u32 %v951, 4294901760
    %953 = vmatmul.f32.gmra.mxu0 %v952
    %v954 = vpop.f32.mrf.mxu0
    %v955 = vadd.f32 %v923, %v954
    %v956 = vand.u32 %v263, 4294901760
    %v957 = vsub.f32 %v263, %v956
    %v958 = vand.u32 %v957, 4294901760
    %959 = vmatmul.f32.gmra.mxu0 %v958
    %v960 = vpop.f32.mrf.mxu0
    %v961 = vadd.f32 %v928, %v960
    %962 = vdwg.mxu0
    %963 = vmatpush.msra.mxu0 0.0
    %964 = vmatpush.msra.mxu0 0.0
    %965 = vmatpush.msra.mxu0 0.0
    %966 = vmatpush.msra.mxu0 0.0
    %967 = vmatpush.msra.mxu0 0.0
    %968 = vmatpush.msra.mxu0 0.0
    %969 = vmatpush.msra.mxu0 0.0
    %970 = vmatpush.msra.mxu0 0.0
    %971 = vmatpush.msra.mxu0 0.0
    %972 = vmatpush.msra.mxu0 0.0
    %973 = vmatpush.msra.mxu0 0.0
    %974 = vmatpush.msra.mxu0 0.0
    %v975 = vand.u32 %v812, 4294901760
    %v976 = vsub.f32 %v812, %v975
    %v977 = vand.u32 %v976, 4294901760
    %978 = vmatpush.msra.mxu0 %v977
    %v979 = vand.u32 %v811, 4294901760
    %v980 = vsub.f32 %v811, %v979
    %v981 = vand.u32 %v980, 4294901760
    %982 = vmatpush.msra.mxu0 %v981
    %v983 = vand.u32 %v810, 4294901760
    %v984 = vsub.f32 %v810, %v983
    %v985 = vand.u32 %v984, 4294901760
    %986 = vmatpush.msra.mxu0 %v985
    %v987 = vand.u32 %v809, 4294901760
    %v988 = vsub.f32 %v809, %v987
    %v989 = vand.u32 %v988, 4294901760
    %990 = vmatpush.msra.mxu0 %v989
    %v991 = vand.u32 %v95, 4294901760
    %992 = vmatmul.f32.gmra.mxu0 %v991
    %v993 = vpop.f32.mrf.mxu0
    %v994 = vadd.f32 %v955, %v993
    %v995 = vand.u32 %v263, 4294901760
    %996 = vmatmul.f32.gmra.mxu0 %v995
    %v997 = vpop.f32.mrf.mxu0
    %v998 = vadd.f32 %v961, %v997
    %999 = vdwg.mxu0
    %1000 = vmatpush.msra.mxu0 0.0
    %1001 = vmatpush.msra.mxu0 0.0
    %1002 = vmatpush.msra.mxu0 0.0
    %1003 = vmatpush.msra.mxu0 0.0
    %1004 = vmatpush.msra.mxu0 0.0
    %1005 = vmatpush.msra.mxu0 0.0
    %1006 = vmatpush.msra.mxu0 0.0
    %1007 = vmatpush.msra.mxu0 0.0
    %1008 = vmatpush.msra.mxu0 0.0
    %1009 = vmatpush.msra.mxu0 0.0
    %1010 = vmatpush.msra.mxu0 0.0
    %1011 = vmatpush.msra.mxu0 0.0
    %v1012 = vand.u32 %v812, 4294901760
    %1013 = vmatpush.msra.mxu0 %v1012
    %v1014 = vand.u32 %v811, 4294901760
    %1015 = vmatpush.msra.mxu0 %v1014
    %v1016 = vand.u32 %v810, 4294901760
    %1017 = vmatpush.msra.mxu0 %v1016
    %v1018 = vand.u32 %v809, 4294901760
    %1019 = vmatpush.msra.mxu0 %v1018
    %v1020 = vand.u32 %v95, 4294901760
    %1021 = vmatmul.f32.gmra.mxu0 %v1020
    %v1022 = vpop.f32.mrf.mxu0
    %v1023 = vadd.f32 %v994, %v1022
    %v1024 = vand.u32 %v263, 4294901760
    %1025 = vmatmul.f32.gmra.mxu0 %v1024
    %v1026 = vpop.f32.mrf.mxu0
    %v1027 = vadd.f32 %v998, %v1026
    %1028 = vdwg.mxu0
    %v1030 = vsel %vm93, %v641, 0
    %v1033 = vsel %vm93, %v803, 0
    %1035 = vmatpush.msra.mxu0 0.0
    %1036 = vmatpush.msra.mxu0 0.0
    %1037 = vmatpush.msra.mxu0 0.0
    %1038 = vmatpush.msra.mxu0 0.0
    %1039 = vmatpush.msra.mxu0 0.0
    %1040 = vmatpush.msra.mxu0 0.0
    %1041 = vmatpush.msra.mxu0 0.0
    %1042 = vmatpush.msra.mxu0 0.0
    %1043 = vmatpush.msra.mxu0 0.0
    %1044 = vmatpush.msra.mxu0 0.0
    %1045 = vmatpush.msra.mxu0 0.0
    %1046 = vmatpush.msra.mxu0 0.0
    %v1047 = vand.u32 %v808, 4294901760
    %1048 = vmatpush.msra.mxu0 %v1047
    %v1049 = vand.u32 %v807, 4294901760
    %1050 = vmatpush.msra.mxu0 %v1049
    %v1051 = vand.u32 %v806, 4294901760
    %1052 = vmatpush.msra.mxu0 %v1051
    %v1053 = vand.u32 %v805, 4294901760
    %1054 = vmatpush.msra.mxu0 %v1053
    %v1055 = vand.u32 %v1030, 4294901760
    %v1056 = vsub.f32 %v1030, %v1055
    %v1057 = vand.u32 %v1056, 4294901760
    %v1058 = vsub.f32 %v1056, %v1057
    %v1059 = vand.u32 %v1058, 4294901760
    %1060 = vmatmul.f32.gmra.mxu0 %v1059
    %v1061 = vpop.f32.mrf.mxu0
    %v1062 = vadd.f32 %v1023, %v1061
    %v1063 = vand.u32 %v1033, 4294901760
    %v1064 = vsub.f32 %v1033, %v1063
    %v1065 = vand.u32 %v1064, 4294901760
    %v1066 = vsub.f32 %v1064, %v1065
    %v1067 = vand.u32 %v1066, 4294901760
    %1068 = vmatmul.f32.gmra.mxu0 %v1067
    %v1069 = vpop.f32.mrf.mxu0
    %v1070 = vadd.f32 %v1027, %v1069
    %1071 = vdwg.mxu0
    %1072 = vmatpush.msra.mxu0 0.0
    %1073 = vmatpush.msra.mxu0 0.0
    %1074 = vmatpush.msra.mxu0 0.0
    %1075 = vmatpush.msra.mxu0 0.0
    %1076 = vmatpush.msra.mxu0 0.0
    %1077 = vmatpush.msra.mxu0 0.0
    %1078 = vmatpush.msra.mxu0 0.0
    %1079 = vmatpush.msra.mxu0 0.0
    %1080 = vmatpush.msra.mxu0 0.0
    %1081 = vmatpush.msra.mxu0 0.0
    %1082 = vmatpush.msra.mxu0 0.0
    %1083 = vmatpush.msra.mxu0 0.0
    %v1084 = vand.u32 %v808, 4294901760
    %v1085 = vsub.f32 %v808, %v1084
    %v1086 = vand.u32 %v1085, 4294901760
    %v1087 = vsub.f32 %v1085, %v1086
    %v1088 = vand.u32 %v1087, 4294901760
    %1089 = vmatpush.msra.mxu0 %v1088
    %v1090 = vand.u32 %v807, 4294901760
    %v1091 = vsub.f32 %v807, %v1090
    %v1092 = vand.u32 %v1091, 4294901760
    %v1093 = vsub.f32 %v1091, %v1092
    %v1094 = vand.u32 %v1093, 4294901760
    %1095 = vmatpush.msra.mxu0 %v1094
    %v1096 = vand.u32 %v806, 4294901760
    %v1097 = vsub.f32 %v806, %v1096
    %v1098 = vand.u32 %v1097, 4294901760
    %v1099 = vsub.f32 %v1097, %v1098
    %v1100 = vand.u32 %v1099, 4294901760
    %1101 = vmatpush.msra.mxu0 %v1100
    %v1102 = vand.u32 %v805, 4294901760
    %v1103 = vsub.f32 %v805, %v1102
    %v1104 = vand.u32 %v1103, 4294901760
    %v1105 = vsub.f32 %v1103, %v1104
    %v1106 = vand.u32 %v1105, 4294901760
    %1107 = vmatpush.msra.mxu0 %v1106
    %v1108 = vand.u32 %v1030, 4294901760
    %1109 = vmatmul.f32.gmra.mxu0 %v1108
    %v1110 = vpop.f32.mrf.mxu0
    %v1111 = vadd.f32 %v1062, %v1110
    %v1112 = vand.u32 %v1033, 4294901760
    %1113 = vmatmul.f32.gmra.mxu0 %v1112
    %v1114 = vpop.f32.mrf.mxu0
    %v1115 = vadd.f32 %v1070, %v1114
    %1116 = vdwg.mxu0
    %1117 = vmatpush.msra.mxu0 0.0
    %1118 = vmatpush.msra.mxu0 0.0
    %1119 = vmatpush.msra.mxu0 0.0
    %1120 = vmatpush.msra.mxu0 0.0
    %1121 = vmatpush.msra.mxu0 0.0
    %1122 = vmatpush.msra.mxu0 0.0
    %1123 = vmatpush.msra.mxu0 0.0
    %1124 = vmatpush.msra.mxu0 0.0
    %1125 = vmatpush.msra.mxu0 0.0
    %1126 = vmatpush.msra.mxu0 0.0
    %1127 = vmatpush.msra.mxu0 0.0
    %1128 = vmatpush.msra.mxu0 0.0
    %v1129 = vand.u32 %v808, 4294901760
    %v1130 = vsub.f32 %v808, %v1129
    %1131 = vmatpush.msra.mxu0 %v1130
    %v1132 = vand.u32 %v807, 4294901760
    %v1133 = vsub.f32 %v807, %v1132
    %1134 = vmatpush.msra.mxu0 %v1133
    %v1135 = vand.u32 %v806, 4294901760
    %v1136 = vsub.f32 %v806, %v1135
    %1137 = vmatpush.msra.mxu0 %v1136
    %v1138 = vand.u32 %v805, 4294901760
    %v1139 = vsub.f32 %v805, %v1138
    %1140 = vmatpush.msra.mxu0 %v1139
    %v1141 = vand.u32 %v1030, 4294901760
    %v1142 = vsub.f32 %v1030, %v1141
    %1143 = vmatmul.f32.gmra.mxu0 %v1142
    %v1144 = vpop.f32.mrf.mxu0
    %v1145 = vadd.f32 %v1111, %v1144
    %v1146 = vand.u32 %v1033, 4294901760
    %v1147 = vsub.f32 %v1033, %v1146
    %1148 = vmatmul.f32.gmra.mxu0 %v1147
    %v1149 = vpop.f32.mrf.mxu0
    %v1150 = vadd.f32 %v1115, %v1149
    %1151 = vdwg.mxu0
    %1152 = vmatpush.msra.mxu0 0.0
    %1153 = vmatpush.msra.mxu0 0.0
    %1154 = vmatpush.msra.mxu0 0.0
    %1155 = vmatpush.msra.mxu0 0.0
    %1156 = vmatpush.msra.mxu0 0.0
    %1157 = vmatpush.msra.mxu0 0.0
    %1158 = vmatpush.msra.mxu0 0.0
    %1159 = vmatpush.msra.mxu0 0.0
    %1160 = vmatpush.msra.mxu0 0.0
    %1161 = vmatpush.msra.mxu0 0.0
    %1162 = vmatpush.msra.mxu0 0.0
    %1163 = vmatpush.msra.mxu0 0.0
    %v1164 = vand.u32 %v808, 4294901760
    %1165 = vmatpush.msra.mxu0 %v1164
    %v1166 = vand.u32 %v807, 4294901760
    %1167 = vmatpush.msra.mxu0 %v1166
    %v1168 = vand.u32 %v806, 4294901760
    %1169 = vmatpush.msra.mxu0 %v1168
    %v1170 = vand.u32 %v805, 4294901760
    %1171 = vmatpush.msra.mxu0 %v1170
    %v1172 = vand.u32 %v1030, 4294901760
    %v1173 = vsub.f32 %v1030, %v1172
    %v1174 = vand.u32 %v1173, 4294901760
    %1175 = vmatmul.f32.gmra.mxu0 %v1174
    %v1176 = vpop.f32.mrf.mxu0
    %v1177 = vadd.f32 %v1145, %v1176
    %v1178 = vand.u32 %v1033, 4294901760
    %v1179 = vsub.f32 %v1033, %v1178
    %v1180 = vand.u32 %v1179, 4294901760
    %1181 = vmatmul.f32.gmra.mxu0 %v1180
    %v1182 = vpop.f32.mrf.mxu0
    %v1183 = vadd.f32 %v1150, %v1182
    %1184 = vdwg.mxu0
    %1185 = vmatpush.msra.mxu0 0.0
    %1186 = vmatpush.msra.mxu0 0.0
    %1187 = vmatpush.msra.mxu0 0.0
    %1188 = vmatpush.msra.mxu0 0.0
    %1189 = vmatpush.msra.mxu0 0.0
    %1190 = vmatpush.msra.mxu0 0.0
    %1191 = vmatpush.msra.mxu0 0.0
    %1192 = vmatpush.msra.mxu0 0.0
    %1193 = vmatpush.msra.mxu0 0.0
    %1194 = vmatpush.msra.mxu0 0.0
    %1195 = vmatpush.msra.mxu0 0.0
    %1196 = vmatpush.msra.mxu0 0.0
    %v1197 = vand.u32 %v808, 4294901760
    %v1198 = vsub.f32 %v808, %v1197
    %v1199 = vand.u32 %v1198, 4294901760
    %1200 = vmatpush.msra.mxu0 %v1199
    %v1201 = vand.u32 %v807, 4294901760
    %v1202 = vsub.f32 %v807, %v1201
    %v1203 = vand.u32 %v1202, 4294901760
    %1204 = vmatpush.msra.mxu0 %v1203
    %v1205 = vand.u32 %v806, 4294901760
    %v1206 = vsub.f32 %v806, %v1205
    %v1207 = vand.u32 %v1206, 4294901760
    %1208 = vmatpush.msra.mxu0 %v1207
    %v1209 = vand.u32 %v805, 4294901760
    %v1210 = vsub.f32 %v805, %v1209
    %v1211 = vand.u32 %v1210, 4294901760
    %1212 = vmatpush.msra.mxu0 %v1211
    %v1213 = vand.u32 %v1030, 4294901760
    %1214 = vmatmul.f32.gmra.mxu0 %v1213
    %v1215 = vpop.f32.mrf.mxu0
    %v1216 = vadd.f32 %v1177, %v1215
    %v1217 = vand.u32 %v1033, 4294901760
    %1218 = vmatmul.f32.gmra.mxu0 %v1217
    %v1219 = vpop.f32.mrf.mxu0
    %v1220 = vadd.f32 %v1183, %v1219
    %1221 = vdwg.mxu0
    %1222 = vmatpush.msra.mxu0 0.0
    %1223 = vmatpush.msra.mxu0 0.0
    %1224 = vmatpush.msra.mxu0 0.0
    %1225 = vmatpush.msra.mxu0 0.0
    %1226 = vmatpush.msra.mxu0 0.0
    %1227 = vmatpush.msra.mxu0 0.0
    %1228 = vmatpush.msra.mxu0 0.0
    %1229 = vmatpush.msra.mxu0 0.0
    %1230 = vmatpush.msra.mxu0 0.0
    %1231 = vmatpush.msra.mxu0 0.0
    %1232 = vmatpush.msra.mxu0 0.0
    %1233 = vmatpush.msra.mxu0 0.0
    %v1234 = vand.u32 %v808, 4294901760
    %1235 = vmatpush.msra.mxu0 %v1234
    %v1236 = vand.u32 %v807, 4294901760
    %1237 = vmatpush.msra.mxu0 %v1236
    %v1238 = vand.u32 %v806, 4294901760
    %1239 = vmatpush.msra.mxu0 %v1238
    %v1240 = vand.u32 %v805, 4294901760
    %1241 = vmatpush.msra.mxu0 %v1240
    %v1242 = vand.u32 %v1030, 4294901760
    %1243 = vmatmul.f32.gmra.mxu0 %v1242
    %v1244 = vpop.f32.mrf.mxu0
    %v1245 = vadd.f32 %v1216, %v1244
    %v1246 = vand.u32 %v1033, 4294901760
    %1247 = vmatmul.f32.gmra.mxu0 %v1246
    %v1248 = vpop.f32.mrf.mxu0
    %v1249 = vadd.f32 %v1220, %v1248
    %1250 = vdwg.mxu0
    %v1251 = vld [vmem:[%s4] sm:$0x1]
    %v1253 = vperm.slane %v1251, 0
    %v1255 = vadd.f32 %v1245, %v1253
    %v1256 = vadd.f32 %v1249, %v1253
    %v1257 = vtanh.pop %v1255
    %v1258 = vtanh.pop %v1256
    %1259 = vst.msk [vmem:[#allocation10] sm:$0xff] %vm93, %v1257
    %1260 = vst.msk [vmem:[#allocation10 + $0x8] sm:$0xff] %vm93, %v1258
    // Predicated region
    $region38: #{tpu_custom_call.1} parent=1 // pred_check
      _
    $region39: #{tpu_custom_call.1} parent=1 // pred_check_branch
      %1262 = sbr.rel (0) target = $region41
    $region40: #{tpu_custom_call.1} parent=1 // pred_region
      %1264 = vsyncadd [#allocation4], 0
      %s1265 = sshll.u32 [#allocation10], 4
      %s1266 = int_to_ptr.vmem [resolvable:$true] %s1265
      %s1267 = sshll.u32 %s5, 4
      %s1268 = int_to_ptr.hbm [resolvable:$true] %s1267
      %1273 = dma.vmem_to_hbm [thread:$0]  %s1266, 256, %s1268, [#allocation4], 128, 128, 8
    $region41: #{tpu_custom_call.1} parent=1 // pred_fallthru
      _
    // Predicated region
    $region42: #{tpu_custom_call.1} parent=1 // pred_check
      _
    $region43: #{tpu_custom_call.1} parent=1 // pred_check_branch
      %1275 = sbr.rel (0) target = $region45
    $region44: #{tpu_custom_call.1} parent=1 // pred_region
      %1277 = vsyncadd [#allocation12], 0
      %s1278 = sshll.u32 [#allocation11], 4
      %s1279 = int_to_ptr.vmem [resolvable:$true] %s1278
      %s1280 = sshll.u32 %s6, 4
      %s1281 = int_to_ptr.hbm [resolvable:$true] %s1280
      %1286 = dma.vmem_to_hbm [thread:$0]  %s1279, 256, %s1281, [#allocation12], 128, 128, 8
    $region45: #{tpu_custom_call.1} parent=1 // pred_fallthru
      _
    // Predicated region
    $region46: #{tpu_custom_call.1} parent=1 // pred_check
      _
    $region47: #{tpu_custom_call.1} parent=1 // pred_check_branch
      %1288 = sbr.rel (0) target = $region49
    $region48: #{tpu_custom_call.1} parent=1 // pred_region
      %1290 = dma.done [#allocation4], 256
    $region49: #{tpu_custom_call.1} parent=1 // pred_fallthru
      _
    // Predicated region
    $region50: #{tpu_custom_call.1} parent=1 // pred_check
      _
    $region51: #{tpu_custom_call.1} parent=1 // pred_check_branch
      %1292 = sbr.rel (0) target = $region53
    $region52: #{tpu_custom_call.1} parent=1 // pred_region
      %1294 = dma.done [#allocation12], 256
    $region53: #{tpu_custom_call.1} parent=1 // pred_fallthru
      _
    %1295 = vsyncpa [#allocation3], 1
    %1296 = vsyncpa [#allocation6], 1
    %1297 = vsyncpa [#allocation9], 1
    %1298 = vsyncpa [#allocation4], 1
    %1299 = vsyncpa [#allocation12], 1

</llo_original>
